<compile_context>
chip_gen: v5e
topology: v5e:2x2
jax: 0.10.0
libtpu: 0.0.40
codegen_flags: <defaults>
</compile_context>

<pallas_src>
import jax
import jax.numpy as jnp
from jax.experimental import pallas as pl
from jax.experimental.pallas import tpu as pltpu

K = 7        # conv kernel size
PAD = 1      # conv padding
EPS = 1e-5   # BatchNorm eps


# ----------------------------------------------------------------------------
# Fused kernel: conv1 -> bn1 -> relu -> conv2 -> bn2 -> residual add -> relu
# ----------------------------------------------------------------------------
def basic_block7x7_kernel(x_ref, w1_ref, g1_ref, b1_ref,
                          w2_ref, g2_ref, b2_ref, o_ref):
    # x_ref : (N, C, L)   input, lane-dense, no pre-padding
    # w*_ref: (C, K*C)    conv weights flattened tap-major: w_flat[o, k*C+i] = W[o, i, k]
    # g*/b* : (C, 1)      BatchNorm gamma / beta
    # o_ref : (N, C, L)   lane-dense output; only [:, :, :L-8] is meaningful
    N, C, L = x_ref.shape
    L1 = L + 2 * PAD - K + 1          # conv1 valid output length (= L - 4)
    L2 = L1 + 2 * PAD - K + 1         # conv2 valid output length (= L - 8)

    lane = jax.lax.broadcasted_iota(jnp.int32, (C, L), 1)     # per-sample lane index
    valid1 = jnp.concatenate([lane < L1] * N, axis=1)         # (C, N*L)
    valid2 = jnp.concatenate([lane < L2] * N, axis=1)         # (C, N*L)

    def tap_stack(samples, l_valid):
        # samples: list of N (C, L) values.  Returns (K*C, N*L) where row-block k
        # holds the sample shifted so lane j reads index j + k - PAD (zero outside
        # [0, L)), samples concatenated along the lane axis.
        taps = []
        for k in range(K):
            off = k - PAD
            rows = []
            for v in samples:
                if off == 0:
                    t = v
                else:
                    t = pltpu.roll(v, (-off) % L, axis=1)     # t[:, j] = v[:, (j+off) % L]
                    if off < 0:
                        # left halo: lanes j < -off wrapped from the right end -> zero-pad
                        t = jnp.where(lane >= -off, t, 0.0)
                    elif off >= L - l_valid + 1:
                        # right halo: wrapped lanes intrude into the valid range -> zero-pad
                        t = jnp.where(lane < L - off, t, 0.0)
                rows.append(t)
            taps.append(jnp.concatenate(rows, axis=1))        # (C, N*L)
        return jnp.concatenate(taps, axis=0)                  # (K*C, N*L)

    def bn_affine(y_masked, g, b, count):
        # Batch-statistics BN folded into per-channel scale/shift (single pass).
        inv = 1.0 / float(count)
        mean = jnp.sum(y_masked, axis=1, keepdims=True) * inv                     # (C, 1)
        var = jnp.sum(y_masked * y_masked, axis=1, keepdims=True) * inv - mean * mean
        scale = g * jax.lax.rsqrt(var + EPS)
        return scale, b - mean * scale

    xs = [x_ref[n] for n in range(N)]                         # N x (C, L), read once
    x_cat = jnp.concatenate(xs, axis=1)                       # (C, N*L) residual

    # -------- conv1: one (C, K*C) @ (K*C, N*L) matmul --------------------------
    a1 = tap_stack(xs, L1)
    y1 = jnp.dot(w1_ref[...], a1, preferred_element_type=jnp.float32)
    y1 = jnp.where(valid1, y1, 0.0)                           # drop per-sample halo garbage
    s1, t1 = bn_affine(y1, g1_ref[...], b1_ref[...], N * L1)
    # relu; zero the invalid tail lanes so they act as conv2's zero padding
    h1 = jnp.where(valid1, jnp.maximum(y1 * s1 + t1, 0.0), 0.0)

    # -------- conv2 -------------------------------------------------------------
    h1s = [h1[:, n * L:(n + 1) * L] for n in range(N)]        # lane-aligned slices
    a2 = tap_stack(h1s, L2)
    y2 = jnp.dot(w2_ref[...], a2, preferred_element_type=jnp.float32)
    s2, t2 = bn_affine(jnp.where(valid2, y2, 0.0), g2_ref[...], b2_ref[...], N * L2)

    # -------- bn2 + residual + relu; full-width (unmasked) stores ---------------
    out = jnp.maximum(y2 * s2 + t2 + x_cat, 0.0)              # lanes >= L2 are don't-care
    for n in range(N):
        o_ref[n] = out[:, n * L:(n + 1) * L]


# ----------------------------------------------------------------------------
# Wrapper
# ----------------------------------------------------------------------------
@jax.jit
def basic_block7x7(x, w1, g1, b1, w2, g2, b2):
    N, C, L = x.shape
    L2 = L + 4 * PAD - 2 * (K - 1)                            # = L - 8
    # Flatten weights tap-major so one matmul covers all 7 taps: (C, K*C)
    w1f = jnp.transpose(w1, (0, 2, 1)).reshape(C, K * C)
    w2f = jnp.transpose(w2, (0, 2, 1)).reshape(C, K * C)
    out_full = pl.pallas_call(
        basic_block7x7_kernel,
        out_shape=jax.ShapeDtypeStruct((N, C, L), jnp.float32),
    )(x, w1f, g1.reshape(C, 1), b1.reshape(C, 1),
      w2f, g2.reshape(C, 1), b2.reshape(C, 1))
    return out_full[:, :, :L2]                                # lane-dense slab, slice outside


# ----------------------------------------------------------------------------
# Pure-JAX reference (mirrors the PyTorch forward, training-mode BatchNorm)
# ----------------------------------------------------------------------------
def reference_forward(x, w1, g1, b1, w2, g2, b2):
    def conv1d(x, w):                       # stride 1, pad 1, no bias
        N, Ci, L = x.shape
        Co, _, Kk = w.shape
        xp = jnp.pad(x, ((0, 0), (0, 0), (PAD, PAD)))
        Lo = L + 2 * PAD - Kk + 1
        out = jnp.zeros((N, Co, Lo), jnp.float32)
        for k in range(Kk):
            out = out + jnp.einsum('oi,nil->nol', w[:, :, k], xp[:, :, k:k + Lo])
        return out

    def bn(x, g, b):                        # batch statistics (biased variance)
        m = jnp.mean(x, axis=(0, 2), keepdims=True)
        v = jnp.mean((x - m) ** 2, axis=(0, 2), keepdims=True)
        return (x - m) / jnp.sqrt(v + EPS) * g.reshape(1, -1, 1) + b.reshape(1, -1, 1)

    out = jax.nn.relu(bn(conv1d(x, w1), g1, b1))
    out = bn(conv1d(out, w2), g2, b2)
    L2 = out.shape[2]
    return jax.nn.relu(x[:, :, :L2] + out)


if __name__ == "__main__":
    key = jax.random.PRNGKey(0)
    kx, k1, k2, k3, k4, k5, k6 = jax.random.split(key, 7)
    N, C, L = 2, 8, 128                     # small shapes consistent with the module
    x = jax.random.normal(kx, (N, C, L), jnp.float32)
    s = 1.0 / (C * K) ** 0.5
    w1 = jax.random.uniform(k1, (C, C, K), jnp.float32, -s, s)
    w2 = jax.random.uniform(k2, (C, C, K), jnp.float32, -s, s)
    g1 = 1.0 + 0.1 * jax.random.normal(k3, (C,), jnp.float32)
    b1 = 0.1 * jax.random.normal(k4, (C,), jnp.float32)
    g2 = 1.0 + 0.1 * jax.random.normal(k5, (C,), jnp.float32)
    b2 = 0.1 * jax.random.normal(k6, (C,), jnp.float32)

    out = basic_block7x7(x, w1, g1, b1, w2, g2, b2)
    out = jax.block_until_ready(out)

    ref = reference_forward(x, w1, g1, b1, w2, g2, b2)
    assert out.shape == (N, C, L - 8), out.shape
    err = jnp.max(jnp.abs(out - ref))
    assert jnp.allclose(out, ref, rtol=1e-3, atol=1e-3), f"max abs diff {err}"
    print("KERNEL_OK")
</pallas_src>

<mosaic_0001>
module attributes {stable_mosaic.version = 11 : i64} {
  func.func @basic_block7x7_kernel(%arg0: memref<2x8x128xf32, #tpu.memory_space<vmem>>, %arg1: memref<8x56xf32, #tpu.memory_space<vmem>>, %arg2: memref<8x1xf32, #tpu.memory_space<vmem>>, %arg3: memref<8x1xf32, #tpu.memory_space<vmem>>, %arg4: memref<8x56xf32, #tpu.memory_space<vmem>>, %arg5: memref<8x1xf32, #tpu.memory_space<vmem>>, %arg6: memref<8x1xf32, #tpu.memory_space<vmem>>, %arg7: memref<2x8x128xf32, #tpu.memory_space<vmem>>) attributes {dimension_semantics = [], scalar_prefetch = 0 : i64, scratch_operands = 0 : i64, tpu.core_type = #tpu.core_type<tc>} {
    %0 = tpu.iota {dimensions = array<i32: 1>} : vector<8x128xi32>
    %c124_i32 = arith.constant 124 : i32
    %1 = vector.broadcast %c124_i32 : i32 to vector<8x128xi32>
    %2 = arith.cmpi slt, %0, %1 : vector<8x128xi32>
    %3 = tpu.concatenate %2, %2 in 1 : vector<8x128xi1>, vector<8x128xi1> -> vector<8x256xi1>
    %c120_i32 = arith.constant 120 : i32
    %4 = vector.broadcast %c120_i32 : i32 to vector<8x128xi32>
    %5 = arith.cmpi slt, %0, %4 : vector<8x128xi32>
    %6 = tpu.concatenate %5, %5 in 1 : vector<8x128xi1>, vector<8x128xi1> -> vector<8x256xi1>
    %c0 = arith.constant 0 : index
    %c0_0 = arith.constant 0 : index
    %c0_1 = arith.constant 0 : index
    %7 = vector.load %arg0[%c0, %c0_0, %c0_1] : memref<2x8x128xf32, #tpu.memory_space<vmem>>, vector<1x8x128xf32>
    %8 = vector.shape_cast %7 : vector<1x8x128xf32> to vector<8x128xf32>
    %c1 = arith.constant 1 : index
    %c0_2 = arith.constant 0 : index
    %c0_3 = arith.constant 0 : index
    %9 = vector.load %arg0[%c1, %c0_2, %c0_3] : memref<2x8x128xf32, #tpu.memory_space<vmem>>, vector<1x8x128xf32>
    %10 = vector.shape_cast %9 : vector<1x8x128xf32> to vector<8x128xf32>
    %11 = tpu.concatenate %8, %10 in 1 : vector<8x128xf32>, vector<8x128xf32> -> vector<8x256xf32>
    %c1_i32 = arith.constant 1 : i32
    %12 = tpu.dynamic_rotate %8 by %c1_i32 dim 1 : vector<8x128xf32>, i32 -> vector<8x128xf32>
    %c1_i32_4 = arith.constant 1 : i32
    %13 = vector.broadcast %c1_i32_4 : i32 to vector<8x128xi32>
    %14 = arith.cmpi sge, %0, %13 : vector<8x128xi32>
    %cst = arith.constant 0.000000e+00 : f32
    %15 = vector.broadcast %cst : f32 to vector<8x128xf32>
    %16 = arith.select %14, %12, %15 : vector<8x128xi1>, vector<8x128xf32>
    %c1_i32_5 = arith.constant 1 : i32
    %17 = tpu.dynamic_rotate %10 by %c1_i32_5 dim 1 : vector<8x128xf32>, i32 -> vector<8x128xf32>
    %c1_i32_6 = arith.constant 1 : i32
    %18 = vector.broadcast %c1_i32_6 : i32 to vector<8x128xi32>
    %19 = arith.cmpi sge, %0, %18 : vector<8x128xi32>
    %cst_7 = arith.constant 0.000000e+00 : f32
    %20 = vector.broadcast %cst_7 : f32 to vector<8x128xf32>
    %21 = arith.select %19, %17, %20 : vector<8x128xi1>, vector<8x128xf32>
    %22 = tpu.concatenate %16, %21 in 1 : vector<8x128xf32>, vector<8x128xf32> -> vector<8x256xf32>
    %23 = tpu.concatenate %8, %10 in 1 : vector<8x128xf32>, vector<8x128xf32> -> vector<8x256xf32>
    %c127_i32 = arith.constant 127 : i32
    %24 = tpu.dynamic_rotate %8 by %c127_i32 dim 1 : vector<8x128xf32>, i32 -> vector<8x128xf32>
    %c127_i32_8 = arith.constant 127 : i32
    %25 = tpu.dynamic_rotate %10 by %c127_i32_8 dim 1 : vector<8x128xf32>, i32 -> vector<8x128xf32>
    %26 = tpu.concatenate %24, %25 in 1 : vector<8x128xf32>, vector<8x128xf32> -> vector<8x256xf32>
    %c126_i32 = arith.constant 126 : i32
    %27 = tpu.dynamic_rotate %8 by %c126_i32 dim 1 : vector<8x128xf32>, i32 -> vector<8x128xf32>
    %c126_i32_9 = arith.constant 126 : i32
    %28 = tpu.dynamic_rotate %10 by %c126_i32_9 dim 1 : vector<8x128xf32>, i32 -> vector<8x128xf32>
    %29 = tpu.concatenate %27, %28 in 1 : vector<8x128xf32>, vector<8x128xf32> -> vector<8x256xf32>
    %c125_i32 = arith.constant 125 : i32
    %30 = tpu.dynamic_rotate %8 by %c125_i32 dim 1 : vector<8x128xf32>, i32 -> vector<8x128xf32>
    %c125_i32_10 = arith.constant 125 : i32
    %31 = tpu.dynamic_rotate %10 by %c125_i32_10 dim 1 : vector<8x128xf32>, i32 -> vector<8x128xf32>
    %32 = tpu.concatenate %30, %31 in 1 : vector<8x128xf32>, vector<8x128xf32> -> vector<8x256xf32>
    %c124_i32_11 = arith.constant 124 : i32
    %33 = tpu.dynamic_rotate %8 by %c124_i32_11 dim 1 : vector<8x128xf32>, i32 -> vector<8x128xf32>
    %c124_i32_12 = arith.constant 124 : i32
    %34 = tpu.dynamic_rotate %10 by %c124_i32_12 dim 1 : vector<8x128xf32>, i32 -> vector<8x128xf32>
    %35 = tpu.concatenate %33, %34 in 1 : vector<8x128xf32>, vector<8x128xf32> -> vector<8x256xf32>
    %c123_i32 = arith.constant 123 : i32
    %36 = tpu.dynamic_rotate %8 by %c123_i32 dim 1 : vector<8x128xf32>, i32 -> vector<8x128xf32>
    %c123_i32_13 = arith.constant 123 : i32
    %37 = vector.broadcast %c123_i32_13 : i32 to vector<8x128xi32>
    %38 = arith.cmpi slt, %0, %37 : vector<8x128xi32>
    %cst_14 = arith.constant 0.000000e+00 : f32
    %39 = vector.broadcast %cst_14 : f32 to vector<8x128xf32>
    %40 = arith.select %38, %36, %39 : vector<8x128xi1>, vector<8x128xf32>
    %c123_i32_15 = arith.constant 123 : i32
    %41 = tpu.dynamic_rotate %10 by %c123_i32_15 dim 1 : vector<8x128xf32>, i32 -> vector<8x128xf32>
    %c123_i32_16 = arith.constant 123 : i32
    %42 = vector.broadcast %c123_i32_16 : i32 to vector<8x128xi32>
    %43 = arith.cmpi slt, %0, %42 : vector<8x128xi32>
    %cst_17 = arith.constant 0.000000e+00 : f32
    %44 = vector.broadcast %cst_17 : f32 to vector<8x128xf32>
    %45 = arith.select %43, %41, %44 : vector<8x128xi1>, vector<8x128xf32>
    %46 = tpu.concatenate %40, %45 in 1 : vector<8x128xf32>, vector<8x128xf32> -> vector<8x256xf32>
    %47 = tpu.concatenate %22, %23, %26, %29, %32, %35, %46 in 0 : vector<8x256xf32>, vector<8x256xf32>, vector<8x256xf32>, vector<8x256xf32>, vector<8x256xf32>, vector<8x256xf32>, vector<8x256xf32> -> vector<56x256xf32>
    %c0_18 = arith.constant 0 : index
    %c0_19 = arith.constant 0 : index
    %48 = vector.load %arg1[%c0_18, %c0_19] : memref<8x56xf32, #tpu.memory_space<vmem>>, vector<8x56xf32>
    %cst_20 = arith.constant dense<0.000000e+00> : vector<8x256xf32>
    %49 = tpu.matmul %48, %47, %cst_20 {dimension_numbers = #tpu.dot_dimension_numbers<[1], [0], [0], [1], [0, 0, 1, 1], [], []>} : vector<8x56xf32>, vector<56x256xf32>, vector<8x256xf32> -> vector<8x256xf32>
    %cst_21 = arith.constant 0.000000e+00 : f32
    %50 = vector.broadcast %cst_21 : f32 to vector<8x256xf32>
    %51 = arith.select %3, %49, %50 : vector<8x256xi1>, vector<8x256xf32>
    %c0_22 = arith.constant 0 : index
    %c0_23 = arith.constant 0 : index
    %52 = vector.load %arg2[%c0_22, %c0_23] : memref<8x1xf32, #tpu.memory_space<vmem>>, vector<8x1xf32>
    %c0_24 = arith.constant 0 : index
    %c0_25 = arith.constant 0 : index
    %53 = vector.load %arg3[%c0_24, %c0_25] : memref<8x1xf32, #tpu.memory_space<vmem>>, vector<8x1xf32>
    %cst_26 = arith.constant dense<0.000000e+00> : vector<8xf32>
    %54 = vector.multi_reduction <add>, %51, %cst_26 [1] : vector<8x256xf32> to vector<8xf32>
    %55 = vector.shape_cast %54 : vector<8xf32> to vector<8x1xf32>
    %cst_27 = arith.constant 0.00403225794 : f32
    %56 = vector.broadcast %cst_27 : f32 to vector<8x1xf32>
    %57 = arith.mulf %55, %56 : vector<8x1xf32>
    %58 = arith.mulf %51, %51 : vector<8x256xf32>
    %cst_28 = arith.constant dense<0.000000e+00> : vector<8xf32>
    %59 = vector.multi_reduction <add>, %58, %cst_28 [1] : vector<8x256xf32> to vector<8xf32>
    %60 = vector.shape_cast %59 : vector<8xf32> to vector<8x1xf32>
    %cst_29 = arith.constant 0.00403225794 : f32
    %61 = vector.broadcast %cst_29 : f32 to vector<8x1xf32>
    %62 = arith.mulf %60, %61 : vector<8x1xf32>
    %63 = arith.mulf %57, %57 : vector<8x1xf32>
    %64 = arith.subf %62, %63 : vector<8x1xf32>
    %cst_30 = arith.constant 9.99999974E-6 : f32
    %65 = vector.broadcast %cst_30 : f32 to vector<8x1xf32>
    %66 = arith.addf %64, %65 : vector<8x1xf32>
    %67 = math.rsqrt %66 : vector<8x1xf32>
    %68 = arith.mulf %52, %67 : vector<8x1xf32>
    %69 = arith.mulf %57, %68 : vector<8x1xf32>
    %70 = arith.subf %53, %69 : vector<8x1xf32>
    %71 = vector.broadcast %68 : vector<8x1xf32> to vector<8x256xf32>
    %72 = arith.mulf %51, %71 : vector<8x256xf32>
    %73 = vector.broadcast %70 : vector<8x1xf32> to vector<8x256xf32>
    %74 = arith.addf %72, %73 : vector<8x256xf32>
    %cst_31 = arith.constant 0.000000e+00 : f32
    %75 = vector.broadcast %cst_31 : f32 to vector<8x256xf32>
    %76 = arith.maximumf %74, %75 : vector<8x256xf32>
    %cst_32 = arith.constant 0.000000e+00 : f32
    %77 = vector.broadcast %cst_32 : f32 to vector<8x256xf32>
    %78 = arith.select %3, %76, %77 : vector<8x256xi1>, vector<8x256xf32>
    %79 = vector.extract_strided_slice %78 {offsets = [0, 0], sizes = [8, 128], strides = [1, 1]} : vector<8x256xf32> to vector<8x128xf32>
    %80 = vector.extract_strided_slice %78 {offsets = [0, 128], sizes = [8, 128], strides = [1, 1]} : vector<8x256xf32> to vector<8x128xf32>
    %c1_i32_33 = arith.constant 1 : i32
    %81 = tpu.dynamic_rotate %79 by %c1_i32_33 dim 1 : vector<8x128xf32>, i32 -> vector<8x128xf32>
    %c1_i32_34 = arith.constant 1 : i32
    %82 = vector.broadcast %c1_i32_34 : i32 to vector<8x128xi32>
    %83 = arith.cmpi sge, %0, %82 : vector<8x128xi32>
    %cst_35 = arith.constant 0.000000e+00 : f32
    %84 = vector.broadcast %cst_35 : f32 to vector<8x128xf32>
    %85 = arith.select %83, %81, %84 : vector<8x128xi1>, vector<8x128xf32>
    %c1_i32_36 = arith.constant 1 : i32
    %86 = tpu.dynamic_rotate %80 by %c1_i32_36 dim 1 : vector<8x128xf32>, i32 -> vector<8x128xf32>
    %c1_i32_37 = arith.constant 1 : i32
    %87 = vector.broadcast %c1_i32_37 : i32 to vector<8x128xi32>
    %88 = arith.cmpi sge, %0, %87 : vector<8x128xi32>
    %cst_38 = arith.constant 0.000000e+00 : f32
    %89 = vector.broadcast %cst_38 : f32 to vector<8x128xf32>
    %90 = arith.select %88, %86, %89 : vector<8x128xi1>, vector<8x128xf32>
    %91 = tpu.concatenate %85, %90 in 1 : vector<8x128xf32>, vector<8x128xf32> -> vector<8x256xf32>
    %92 = tpu.concatenate %79, %80 in 1 : vector<8x128xf32>, vector<8x128xf32> -> vector<8x256xf32>
    %c127_i32_39 = arith.constant 127 : i32
    %93 = tpu.dynamic_rotate %79 by %c127_i32_39 dim 1 : vector<8x128xf32>, i32 -> vector<8x128xf32>
    %c127_i32_40 = arith.constant 127 : i32
    %94 = tpu.dynamic_rotate %80 by %c127_i32_40 dim 1 : vector<8x128xf32>, i32 -> vector<8x128xf32>
    %95 = tpu.concatenate %93, %94 in 1 : vector<8x128xf32>, vector<8x128xf32> -> vector<8x256xf32>
    %c126_i32_41 = arith.constant 126 : i32
    %96 = tpu.dynamic_rotate %79 by %c126_i32_41 dim 1 : vector<8x128xf32>, i32 -> vector<8x128xf32>
    %c126_i32_42 = arith.constant 126 : i32
    %97 = tpu.dynamic_rotate %80 by %c126_i32_42 dim 1 : vector<8x128xf32>, i32 -> vector<8x128xf32>
    %98 = tpu.concatenate %96, %97 in 1 : vector<8x128xf32>, vector<8x128xf32> -> vector<8x256xf32>
    %c125_i32_43 = arith.constant 125 : i32
    %99 = tpu.dynamic_rotate %79 by %c125_i32_43 dim 1 : vector<8x128xf32>, i32 -> vector<8x128xf32>
    %c125_i32_44 = arith.constant 125 : i32
    %100 = tpu.dynamic_rotate %80 by %c125_i32_44 dim 1 : vector<8x128xf32>, i32 -> vector<8x128xf32>
    %101 = tpu.concatenate %99, %100 in 1 : vector<8x128xf32>, vector<8x128xf32> -> vector<8x256xf32>
    %c124_i32_45 = arith.constant 124 : i32
    %102 = tpu.dynamic_rotate %79 by %c124_i32_45 dim 1 : vector<8x128xf32>, i32 -> vector<8x128xf32>
    %c124_i32_46 = arith.constant 124 : i32
    %103 = tpu.dynamic_rotate %80 by %c124_i32_46 dim 1 : vector<8x128xf32>, i32 -> vector<8x128xf32>
    %104 = tpu.concatenate %102, %103 in 1 : vector<8x128xf32>, vector<8x128xf32> -> vector<8x256xf32>
    %c123_i32_47 = arith.constant 123 : i32
    %105 = tpu.dynamic_rotate %79 by %c123_i32_47 dim 1 : vector<8x128xf32>, i32 -> vector<8x128xf32>
    %c123_i32_48 = arith.constant 123 : i32
    %106 = tpu.dynamic_rotate %80 by %c123_i32_48 dim 1 : vector<8x128xf32>, i32 -> vector<8x128xf32>
    %107 = tpu.concatenate %105, %106 in 1 : vector<8x128xf32>, vector<8x128xf32> -> vector<8x256xf32>
    %108 = tpu.concatenate %91, %92, %95, %98, %101, %104, %107 in 0 : vector<8x256xf32>, vector<8x256xf32>, vector<8x256xf32>, vector<8x256xf32>, vector<8x256xf32>, vector<8x256xf32>, vector<8x256xf32> -> vector<56x256xf32>
    %c0_49 = arith.constant 0 : index
    %c0_50 = arith.constant 0 : index
    %109 = vector.load %arg4[%c0_49, %c0_50] : memref<8x56xf32, #tpu.memory_space<vmem>>, vector<8x56xf32>
    %cst_51 = arith.constant dense<0.000000e+00> : vector<8x256xf32>
    %110 = tpu.matmul %109, %108, %cst_51 {dimension_numbers = #tpu.dot_dimension_numbers<[1], [0], [0], [1], [0, 0, 1, 1], [], []>} : vector<8x56xf32>, vector<56x256xf32>, vector<8x256xf32> -> vector<8x256xf32>
    %cst_52 = arith.constant 0.000000e+00 : f32
    %111 = vector.broadcast %cst_52 : f32 to vector<8x256xf32>
    %112 = arith.select %6, %110, %111 : vector<8x256xi1>, vector<8x256xf32>
    %c0_53 = arith.constant 0 : index
    %c0_54 = arith.constant 0 : index
    %113 = vector.load %arg5[%c0_53, %c0_54] : memref<8x1xf32, #tpu.memory_space<vmem>>, vector<8x1xf32>
    %c0_55 = arith.constant 0 : index
    %c0_56 = arith.constant 0 : index
    %114 = vector.load %arg6[%c0_55, %c0_56] : memref<8x1xf32, #tpu.memory_space<vmem>>, vector<8x1xf32>
    %cst_57 = arith.constant dense<0.000000e+00> : vector<8xf32>
    %115 = vector.multi_reduction <add>, %112, %cst_57 [1] : vector<8x256xf32> to vector<8xf32>
    %116 = vector.shape_cast %115 : vector<8xf32> to vector<8x1xf32>
    %cst_58 = arith.constant 0.00416666688 : f32
    %117 = vector.broadcast %cst_58 : f32 to vector<8x1xf32>
    %118 = arith.mulf %116, %117 : vector<8x1xf32>
    %119 = arith.mulf %112, %112 : vector<8x256xf32>
    %cst_59 = arith.constant dense<0.000000e+00> : vector<8xf32>
    %120 = vector.multi_reduction <add>, %119, %cst_59 [1] : vector<8x256xf32> to vector<8xf32>
    %121 = vector.shape_cast %120 : vector<8xf32> to vector<8x1xf32>
    %cst_60 = arith.constant 0.00416666688 : f32
    %122 = vector.broadcast %cst_60 : f32 to vector<8x1xf32>
    %123 = arith.mulf %121, %122 : vector<8x1xf32>
    %124 = arith.mulf %118, %118 : vector<8x1xf32>
    %125 = arith.subf %123, %124 : vector<8x1xf32>
    %cst_61 = arith.constant 9.99999974E-6 : f32
    %126 = vector.broadcast %cst_61 : f32 to vector<8x1xf32>
    %127 = arith.addf %125, %126 : vector<8x1xf32>
    %128 = math.rsqrt %127 : vector<8x1xf32>
    %129 = arith.mulf %113, %128 : vector<8x1xf32>
    %130 = arith.mulf %118, %129 : vector<8x1xf32>
    %131 = arith.subf %114, %130 : vector<8x1xf32>
    %132 = vector.broadcast %129 : vector<8x1xf32> to vector<8x256xf32>
    %133 = arith.mulf %110, %132 : vector<8x256xf32>
    %134 = vector.broadcast %131 : vector<8x1xf32> to vector<8x256xf32>
    %135 = arith.addf %133, %134 : vector<8x256xf32>
    %136 = arith.addf %135, %11 : vector<8x256xf32>
    %cst_62 = arith.constant 0.000000e+00 : f32
    %137 = vector.broadcast %cst_62 : f32 to vector<8x256xf32>
    %138 = arith.maximumf %136, %137 : vector<8x256xf32>
    %139 = vector.extract_strided_slice %138 {offsets = [0, 0], sizes = [8, 128], strides = [1, 1]} : vector<8x256xf32> to vector<8x128xf32>
    %c0_63 = arith.constant 0 : index
    %c0_64 = arith.constant 0 : index
    %c0_65 = arith.constant 0 : index
    %140 = vector.load %arg7[%c0_63, %c0_64, %c0_65] : memref<2x8x128xf32, #tpu.memory_space<vmem>>, vector<1x8x128xf32>
    %141 = vector.shape_cast %140 : vector<1x8x128xf32> to vector<8x128xf32>
    %142 = vector.shape_cast %139 : vector<8x128xf32> to vector<1x8x128xf32>
    tpu.vector_store %arg7[%c0_63, %c0_64, %c0_65], %142 {strides = array<i32>} : memref<2x8x128xf32, #tpu.memory_space<vmem>>, vector<1x8x128xf32>,
    %143 = vector.extract_strided_slice %138 {offsets = [0, 128], sizes = [8, 128], strides = [1, 1]} : vector<8x256xf32> to vector<8x128xf32>
    %c1_66 = arith.constant 1 : index
    %c0_67 = arith.constant 0 : index
    %c0_68 = arith.constant 0 : index
    %144 = vector.load %arg7[%c1_66, %c0_67, %c0_68] : memref<2x8x128xf32, #tpu.memory_space<vmem>>, vector<1x8x128xf32>
    %145 = vector.shape_cast %144 : vector<1x8x128xf32> to vector<8x128xf32>
    %146 = vector.shape_cast %143 : vector<8x128xf32> to vector<1x8x128xf32>
    tpu.vector_store %arg7[%c1_66, %c0_67, %c0_68], %146 {strides = array<i32>} : memref<2x8x128xf32, #tpu.memory_space<vmem>>, vector<1x8x128xf32>,
    return
  }
}

</mosaic_0001>

<llo_original>
// kernel: basic_block7x7.1
$region0: #{basic_block7x7.1}
  #allocation0 [shape = 'u32[]', space=smem, size = 0x4, offset = 0x4, fixed_abs, tag = 'smem constant byte address 0x4 - core index']
  #allocation1 [shape = 'u32[72,128]{1,0:T(1,128)}', space=vmem, size = 0x9000, scoped, tag = 'internal scratch']
  %s0 = inlined_call_operand.vmem [shape: f32[2,8,128], index: 0, kind: input, shape index: {}]
  %s1 = inlined_call_operand.vmem [shape: f32[8,56], index: 1, kind: input, shape index: {}]
  %s2 = inlined_call_operand.vmem [shape: f32[8,1], index: 2, kind: input, shape index: {}]
  %s3 = inlined_call_operand.vmem [shape: f32[8,1], index: 3, kind: input, shape index: {}]
  %s4 = inlined_call_operand.vmem [shape: f32[8,56], index: 4, kind: input, shape index: {}]
  %s5 = inlined_call_operand.vmem [shape: f32[8,1], index: 5, kind: input, shape index: {}]
  %s6 = inlined_call_operand.vmem [shape: f32[8,1], index: 6, kind: input, shape index: {}]
  %s7 = inlined_call_operand.hbm [shape: f32[2,8,128], index: 7, kind: output, shape index: {}]
  %s8 = sld [smem:[#allocation0]]
  $region38: #{basic_block7x7.1} parent=0
    _
  %s10 = ssub.s32 1, %s8
  %s11 = scalar_select 0, %s10, %s8
  $region1: #{basic_block7x7.1} parent=0
    #allocation2 [shape = 'u8[8192]{0}', space=vmem, size = 0x2000, scoped, tag = 'output window, operand 0, single buffered']
    #allocation3 [shape = 's32[1]{0}', space=sflag, size = 0x4, scoped, tag = 'scoped memory for basic_block7x7.1']
    %12 = vsyncpa [#allocation3], 0
    // Predicated region
    $region2: #{basic_block7x7.1} parent=1 // pred_check
      _
    $region3: #{basic_block7x7.1} parent=1 // pred_check_branch
      %14 = sbr.rel (0) target = $region5
    $region4: #{basic_block7x7.1} parent=1 // pred_region
      _
    $region5: #{basic_block7x7.1} parent=1 // pred_fallthru
      _
    // Predicated region
    $region6: #{basic_block7x7.1} parent=1 // pred_check
      _
    $region7: #{basic_block7x7.1} parent=1 // pred_check_branch
      %16 = sbr.rel (0) target = $region9
    $region8: #{basic_block7x7.1} parent=1 // pred_region
      _
    $region9: #{basic_block7x7.1} parent=1 // pred_fallthru
      _
    // Predicated region
    $region10: #{basic_block7x7.1} parent=1 // pred_check
      _
    $region11: #{basic_block7x7.1} parent=1 // pred_check_branch
      %18 = sbr.rel (0) target = $region13
    $region12: #{basic_block7x7.1} parent=1 // pred_region
      _
    $region13: #{basic_block7x7.1} parent=1 // pred_fallthru
      _
    // Predicated region
    $region14: #{basic_block7x7.1} parent=1 // pred_check
      _
    $region15: #{basic_block7x7.1} parent=1 // pred_check_branch
      %20 = sbr.rel (0) target = $region17
    $region16: #{basic_block7x7.1} parent=1 // pred_region
      _
    $region17: #{basic_block7x7.1} parent=1 // pred_fallthru
      _
    // Predicated region
    $region18: #{basic_block7x7.1} parent=1 // pred_check
      _
    $region19: #{basic_block7x7.1} parent=1 // pred_check_branch
      %22 = sbr.rel (0) target = $region21
    $region20: #{basic_block7x7.1} parent=1 // pred_region
      _
    $region21: #{basic_block7x7.1} parent=1 // pred_fallthru
      _
    // Predicated region
    $region22: #{basic_block7x7.1} parent=1 // pred_check
      _
    $region23: #{basic_block7x7.1} parent=1 // pred_check_branch
      %24 = sbr.rel (0) target = $region25
    $region24: #{basic_block7x7.1} parent=1 // pred_region
      _
    $region25: #{basic_block7x7.1} parent=1 // pred_fallthru
      _
    // Predicated region
    $region26: #{basic_block7x7.1} parent=1 // pred_check
      _
    $region27: #{basic_block7x7.1} parent=1 // pred_check_branch
      %26 = sbr.rel (0) target = $region29
    $region28: #{basic_block7x7.1} parent=1 // pred_region
      _
    $region29: #{basic_block7x7.1} parent=1 // pred_fallthru
      _
    %v27 = vlaneseq
    %v28 = vand.u32 %v27, 127
    %vm29 = vcmp.lt.s32.totalorder %v28, 124
    %vm30 = vcmp.lt.s32.totalorder %v28, 120
    %v31 = vld [vmem:[%s0] sm:$0xff]
    %s32 = scalar_lea.vmem %s0, 8
    %v33 = vld [vmem:[%s32] sm:$0xff]
    %34 = vrot.lane.b32.xlu0 %v31, 1
    %v35 = vpop.permute.xlu0 %34
    %vm36 = vcmp.ge.s32.totalorder %v28, 1
    %v37 = vsel %vm36, %v35, 0.0
    %38 = vrot.lane.b32.xlu0 %v33, 1
    %v39 = vpop.permute.xlu0 %38
    %v40 = vsel %vm36, %v39, 0.0
    %41 = vrot.lane.b32.xlu0 %v31, 127
    %v42 = vpop.permute.xlu0 %41
    %43 = vrot.lane.b32.xlu0 %v33, 127
    %v44 = vpop.permute.xlu0 %43
    %45 = vrot.lane.b32.xlu0 %v31, 126
    %v46 = vpop.permute.xlu0 %45
    %47 = vrot.lane.b32.xlu0 %v33, 126
    %v48 = vpop.permute.xlu0 %47
    %49 = vrot.lane.b32.xlu0 %v31, 125
    %v50 = vpop.permute.xlu0 %49
    %51 = vrot.lane.b32.xlu0 %v33, 125
    %v52 = vpop.permute.xlu0 %51
    %53 = vrot.lane.b32.xlu0 %v31, 124
    %v54 = vpop.permute.xlu0 %53
    %55 = vrot.lane.b32.xlu0 %v33, 124
    %v56 = vpop.permute.xlu0 %55
    %57 = vrot.lane.b32.xlu0 %v31, 123
    %v58 = vpop.permute.xlu0 %57
    %vm59 = vcmp.lt.s32.totalorder %v28, 123
    %v60 = vsel %vm59, %v58, 0.0
    %61 = vrot.lane.b32.xlu0 %v33, 123
    %v62 = vpop.permute.xlu0 %61
    %v63 = vsel %vm59, %v62, 0.0
    %v64 = vld [vmem:[%s1] sm:$0xff]
    %vm65 = vcmask 457728
    %v67 = vsel %vm65, %v64, 0
    %69 = vmatpush.msra.mxu0 0.0
    %70 = vmatpush.msra.mxu0 0.0
    %71 = vmatpush.msra.mxu0 0.0
    %72 = vmatpush.msra.mxu0 0.0
    %73 = vmatpush.msra.mxu0 0.0
    %74 = vmatpush.msra.mxu0 0.0
    %75 = vmatpush.msra.mxu0 0.0
    %76 = vmatpush.msra.mxu0 0.0
    %77 = vmatpush.msra.mxu0 0.0
    %78 = vmatpush.msra.mxu0 %v60
    %79 = vmatpush.msra.mxu0 %v54
    %80 = vmatpush.msra.mxu0 %v50
    %81 = vmatpush.msra.mxu0 %v46
    %82 = vmatpush.msra.mxu0 %v42
    %83 = vmatpush.msra.mxu0 %v31
    %84 = vmatpush.msra.mxu0 %v37
    %85 = vmatmul.f32.gmra.mxu0 %v67
    %v86 = vpop.f32.mrf.mxu0
    %v87 = vadd.f32 0.0, %v86
    %88 = vdwg.mxu0
    %89 = vmatpush.msra.mxu0 0.0
    %90 = vmatpush.msra.mxu0 0.0
    %91 = vmatpush.msra.mxu0 0.0
    %92 = vmatpush.msra.mxu0 0.0
    %93 = vmatpush.msra.mxu0 0.0
    %94 = vmatpush.msra.mxu0 0.0
    %95 = vmatpush.msra.mxu0 0.0
    %96 = vmatpush.msra.mxu0 0.0
    %97 = vmatpush.msra.mxu0 0.0
    %98 = vmatpush.msra.mxu0 %v63
    %99 = vmatpush.msra.mxu0 %v56
    %100 = vmatpush.msra.mxu0 %v52
    %101 = vmatpush.msra.mxu0 %v48
    %102 = vmatpush.msra.mxu0 %v44
    %103 = vmatpush.msra.mxu0 %v33
    %104 = vmatpush.msra.mxu0 %v40
    %105 = vmatmul.f32.gmra.mxu0 %v67
    %v106 = vpop.f32.mrf.mxu0
    %v107 = vadd.f32 0.0, %v106
    %108 = vdwg.mxu0
    %v109 = vsel %vm29, %v87, 0.0
    %v110 = vsel %vm29, %v107, 0.0
    %v111 = vld [vmem:[%s2] sm:$0xff]
    %v112 = vld [vmem:[%s3] sm:$0xff]
    %v113 = vadd.f32 %v109, %v110
    %114 = vadd.xlane.f32.xlu0 %v113
    %v115 = vpop.xlane.xlu0 %114
    %v116 = vmul.f32 %v115, 0.004032258
    %v117 = vmul.f32 %v109, %v109
    %v118 = vmul.f32 %v110, %v110
    %v119 = vadd.f32 %v117, %v118
    %120 = vadd.xlane.f32.xlu0 %v119
    %v121 = vpop.xlane.xlu0 %120
    %v122 = vmul.f32 %v121, 0.004032258
    %v123 = vmul.f32 %v116, %v116
    %v124 = vsub.f32 %v122, %v123
    %v125 = vadd.f32 %v124, 1e-05
    %v126 = vrsqrt.pop %v125
    %v127 = vmul.f32 %v126, %v125
    %v128 = vmul.f32 %v127, %v126
    %v129 = vmul.f32 0.5, %v128
    %v130 = vsub.f32 1.5, %v129
    %v131 = vmul.f32 %v126, %v130
    %vm132 = vweird.f32 %v125
    %vm133 = vweird.f32 %v126
    %vm134 = vmor %vm132, %vm133
    %v135 = vsel %vm134, %v126, %v131
    %v136 = vmul.f32 %v111, %v135
    %v137 = vmul.f32 %v116, %v136
    %v138 = vsub.f32 %v112, %v137
    %140 = vset.pattern.permute.xlu0 0
    %141 = vperm.xlu0 %140, %v136
    %v142 = vpop.permute.xlu0 %141
    %v144 = vmul.f32 %v109, %v142
    %v145 = vmul.f32 %v110, %v142
    %147 = vset.pattern.permute.xlu0 0
    %148 = vperm.xlu0 %147, %v138
    %v149 = vpop.permute.xlu0 %148
    %v151 = vadd.f32 %v144, %v149
    %v152 = vadd.f32 %v145, %v149
    %v153 = vmax.f32 %v151, 0.0
    %v154 = vmax.f32 %v152, 0.0
    %v155 = vsel %vm29, %v153, 0.0
    %v156 = vsel %vm29, %v154, 0.0
    %157 = vrot.lane.b32.xlu0 %v155, 1
    %v158 = vpop.permute.xlu0 %157
    %v159 = vsel %vm36, %v158, 0.0
    %160 = vrot.lane.b32.xlu0 %v156, 1
    %v161 = vpop.permute.xlu0 %160
    %v162 = vsel %vm36, %v161, 0.0
    %163 = vrot.lane.b32.xlu0 %v155, 127
    %v164 = vpop.permute.xlu0 %163
    %165 = vrot.lane.b32.xlu0 %v156, 127
    %v166 = vpop.permute.xlu0 %165
    %167 = vrot.lane.b32.xlu0 %v155, 126
    %v168 = vpop.permute.xlu0 %167
    %169 = vrot.lane.b32.xlu0 %v156, 126
    %v170 = vpop.permute.xlu0 %169
    %171 = vrot.lane.b32.xlu0 %v155, 125
    %v172 = vpop.permute.xlu0 %171
    %173 = vrot.lane.b32.xlu0 %v156, 125
    %v174 = vpop.permute.xlu0 %173
    %175 = vrot.lane.b32.xlu0 %v155, 124
    %v176 = vpop.permute.xlu0 %175
    %177 = vrot.lane.b32.xlu0 %v156, 124
    %v178 = vpop.permute.xlu0 %177
    %179 = vrot.lane.b32.xlu0 %v155, 123
    %v180 = vpop.permute.xlu0 %179
    %181 = vrot.lane.b32.xlu0 %v156, 123
    %v182 = vpop.permute.xlu0 %181
    %v183 = vld [vmem:[%s4] sm:$0xff]
    %v185 = vsel %vm65, %v183, 0
    %187 = vmatpush.msra.mxu0 0.0
    %188 = vmatpush.msra.mxu0 0.0
    %189 = vmatpush.msra.mxu0 0.0
    %190 = vmatpush.msra.mxu0 0.0
    %191 = vmatpush.msra.mxu0 0.0
    %192 = vmatpush.msra.mxu0 0.0
    %193 = vmatpush.msra.mxu0 0.0
    %194 = vmatpush.msra.mxu0 0.0
    %195 = vmatpush.msra.mxu0 0.0
    %196 = vmatpush.msra.mxu0 %v180
    %197 = vmatpush.msra.mxu0 %v176
    %198 = vmatpush.msra.mxu0 %v172
    %199 = vmatpush.msra.mxu0 %v168
    %200 = vmatpush.msra.mxu0 %v164
    %201 = vmatpush.msra.mxu0 %v155
    %202 = vmatpush.msra.mxu0 %v159
    %203 = vmatmul.f32.gmra.mxu0 %v185
    %v204 = vpop.f32.mrf.mxu0
    %v205 = vadd.f32 0.0, %v204
    %206 = vdwg.mxu0
    %207 = vmatpush.msra.mxu0 0.0
    %208 = vmatpush.msra.mxu0 0.0
    %209 = vmatpush.msra.mxu0 0.0
    %210 = vmatpush.msra.mxu0 0.0
    %211 = vmatpush.msra.mxu0 0.0
    %212 = vmatpush.msra.mxu0 0.0
    %213 = vmatpush.msra.mxu0 0.0
    %214 = vmatpush.msra.mxu0 0.0
    %215 = vmatpush.msra.mxu0 0.0
    %216 = vmatpush.msra.mxu0 %v182
    %217 = vmatpush.msra.mxu0 %v178
    %218 = vmatpush.msra.mxu0 %v174
    %219 = vmatpush.msra.mxu0 %v170
    %220 = vmatpush.msra.mxu0 %v166
    %221 = vmatpush.msra.mxu0 %v156
    %222 = vmatpush.msra.mxu0 %v162
    %223 = vmatmul.f32.gmra.mxu0 %v185
    %v224 = vpop.f32.mrf.mxu0
    %v225 = vadd.f32 0.0, %v224
    %226 = vdwg.mxu0
    %v227 = vsel %vm30, %v205, 0.0
    %v228 = vsel %vm30, %v225, 0.0
    %v229 = vld [vmem:[%s5] sm:$0xff]
    %v230 = vld [vmem:[%s6] sm:$0xff]
    %v231 = vadd.f32 %v227, %v228
    %232 = vadd.xlane.f32.xlu0 %v231
    %v233 = vpop.xlane.xlu0 %232
    %v234 = vmul.f32 %v233, 0.004166667
    %v235 = vmul.f32 %v227, %v227
    %v236 = vmul.f32 %v228, %v228
    %v237 = vadd.f32 %v235, %v236
    %238 = vadd.xlane.f32.xlu0 %v237
    %v239 = vpop.xlane.xlu0 %238
    %v240 = vmul.f32 %v239, 0.004166667
    %v241 = vmul.f32 %v234, %v234
    %v242 = vsub.f32 %v240, %v241
    %v243 = vadd.f32 %v242, 1e-05
    %v244 = vrsqrt.pop %v243
    %v245 = vmul.f32 %v244, %v243
    %v246 = vmul.f32 %v245, %v244
    %v247 = vmul.f32 0.5, %v246
    %v248 = vsub.f32 1.5, %v247
    %v249 = vmul.f32 %v244, %v248
    %vm250 = vweird.f32 %v243
    %vm251 = vweird.f32 %v244
    %vm252 = vmor %vm250, %vm251
    %v253 = vsel %vm252, %v244, %v249
    %v254 = vmul.f32 %v229, %v253
    %v255 = vmul.f32 %v234, %v254
    %v256 = vsub.f32 %v230, %v255
    %258 = vset.pattern.permute.xlu0 0
    %259 = vperm.xlu0 %258, %v254
    %v260 = vpop.permute.xlu0 %259
    %v262 = vmul.f32 %v205, %v260
    %v263 = vmul.f32 %v225, %v260
    %265 = vset.pattern.permute.xlu0 0
    %266 = vperm.xlu0 %265, %v256
    %v267 = vpop.permute.xlu0 %266
    %v269 = vadd.f32 %v262, %v267
    %v270 = vadd.f32 %v263, %v267
    %v271 = vadd.f32 %v269, %v31
    %v272 = vadd.f32 %v270, %v33
    %v273 = vmax.f32 %v271, 0.0
    %v274 = vmax.f32 %v272, 0.0
    %275 = vst [vmem:[#allocation2] sm:$0xff] %v273
    %s276 = scalar_lea.vmem [#allocation2], 8
    %277 = vst [vmem:[%s276] sm:$0xff] %v274
    // Predicated region
    $region30: #{basic_block7x7.1} parent=1 // pred_check
      _
    $region31: #{basic_block7x7.1} parent=1 // pred_check_branch
      %279 = sbr.rel (0) target = $region33
    $region32: #{basic_block7x7.1} parent=1 // pred_region
      %281 = vsyncadd [#allocation3], 0
      %s282 = sshll.u32 [#allocation2], 4
      %s283 = int_to_ptr.vmem [resolvable:$true] %s282
      %s284 = sshll.u32 %s7, 4
      %s285 = int_to_ptr.hbm [resolvable:$true] %s284
      %290 = dma.vmem_to_hbm [thread:$0]  %s283, 256, %s285, [#allocation3], 128, 128, 8
    $region33: #{basic_block7x7.1} parent=1 // pred_fallthru
      _
    // Predicated region
    $region34: #{basic_block7x7.1} parent=1 // pred_check
      _
    $region35: #{basic_block7x7.1} parent=1 // pred_check_branch
      %292 = sbr.rel (0) target = $region37
    $region36: #{basic_block7x7.1} parent=1 // pred_region
      %294 = dma.done [#allocation3], 256
    $region37: #{basic_block7x7.1} parent=1 // pred_fallthru
      _
    %295 = vsyncpa [#allocation3], 1

</llo_original>
